<compile_context>
chip_gen: v6e
topology: v6e:2x2x1
jax: 0.10.0
libtpu: 0.0.40
codegen_flags: <defaults>
</compile_context>

<pallas_src>
import functools

import jax
import jax.numpy as jnp
from jax.experimental import pallas as pl
from jax.experimental.pallas import tpu as pltpu


def _round_up(x, m):
    return (x + m - 1) // m * m


# --------------------------------------------------------------------------
# Stage 1: gate computation (tiny, runs once, whole-array VMEM blocks)
# --------------------------------------------------------------------------
def _gate_kernel(x1_ref, w1t_ref, w2t_ref, g_ref, *, inv_layers):
    # x1_ref : (B, C_in, N), w1t_ref: (C_in, H), w2t_ref: (H, L+1), g_ref: (B, L+1)
    se = jnp.mean(x1_ref[...], axis=2)                                  # (B, C_in)
    h = jnp.dot(se, w1t_ref[...], preferred_element_type=jnp.float32)  # (B, H)
    h = jnp.maximum(h, 0.0)
    g = jnp.dot(h, w2t_ref[...], preferred_element_type=jnp.float32)   # (B, L+1)
    g = jax.nn.sigmoid(g)
    # Fold the 1/(L+1) of the mean over the layer axis into the gate.
    g_ref[...] = g * inv_layers


# --------------------------------------------------------------------------
# Stage 2: streamed gated mean over layers, gridded over M = C*N*T
# --------------------------------------------------------------------------
def _fuse_kernel(g_ref, x2_ref, o_ref, *, num_layers):
    # g_ref : (B, L+1)            (resident, already scaled by 1/(L+1))
    # x2_ref: (B, L+1, TILE_M)    (streamed tile)
    # o_ref : (B, TILE_M)
    g = g_ref[...]
    x2 = x2_ref[...]
    acc = x2[:, 0, :] * g[:, 0:1]
    for l in range(1, num_layers):          # static unroll: pure VPU FMAs
        acc = acc + x2[:, l, :] * g[:, l:l + 1]
    o_ref[...] = acc                        # lane-dense store


def gated_fusion_forward(input1, input2, w1, w2, *, tile_m=2048):
    """input1: (B, C_in, N); input2: (B, L+1, C, N, T);
    w1: (H, C_in) dense1.weight; w2: (L+1, H) dense2.weight (both bias=False)."""
    B, Lp1, C, N, T = input2.shape
    M = C * N * T

    f32 = jnp.float32
    input1 = input1.astype(f32)
    input2 = input2.astype(f32)

    vmem = pl.BlockSpec(memory_space=pltpu.MemorySpace.VMEM)

    # ---------------- Stage 1: gate (one-shot, tiny) ----------------
    gate = pl.pallas_call(
        functools.partial(_gate_kernel, inv_layers=1.0 / Lp1),
        out_shape=jax.ShapeDtypeStruct((B, Lp1), f32),
        in_specs=[vmem, vmem, vmem],
        out_specs=vmem,
    )(input1, w1.T.astype(f32), w2.T.astype(f32))

    # ---------------- Stage 2: streamed weighted mean ---------------
    x2_flat = input2.reshape(B, Lp1, M)

    # Lane-dense tile: multiple of 128, capped both by a target size and by a
    # conservative VMEM budget (~8 MiB for the double-buffered x2 tiles), so
    # the same code fits v5e/v6e scoped defaults and v7x's smaller VMEM.
    sublanes = _round_up(Lp1, 8)                      # f32 sublane padding of the layer axis
    tile_by_vmem = (8 * 1024 * 1024) // (2 * B * sublanes * 4)
    tile_by_vmem = max(128, (tile_by_vmem // 128) * 128)
    tile = min(tile_m, tile_by_vmem, _round_up(M, 128))
    tile = max(128, (tile // 128) * 128)

    M_pad = _round_up(M, tile)
    if M_pad != M:
        x2_flat = jnp.pad(x2_flat, ((0, 0), (0, 0), (0, M_pad - M)))

    grid = (M_pad // tile,)

    out_flat = pl.pallas_call(
        functools.partial(_fuse_kernel, num_layers=Lp1),
        out_shape=jax.ShapeDtypeStruct((B, M_pad), f32),
        grid_spec=pltpu.PrefetchScalarGridSpec(
            num_scalar_prefetch=0,
            grid=grid,
            in_specs=[
                pl.BlockSpec((B, Lp1), lambda m: (0, 0)),        # gate: resident
                pl.BlockSpec((B, Lp1, tile), lambda m: (0, 0, m)),  # streamed tile
            ],
            out_specs=pl.BlockSpec((B, tile), lambda m: (0, m)),
        ),
        compiler_params=pltpu.CompilerParams(
            dimension_semantics=("parallel",),   # megacore sharding on v7x
        ),
    )(gate, x2_flat)

    if M_pad != M:
        out_flat = out_flat[:, :M]
    return out_flat.reshape(B, C, N, T)


# --------------------------------------------------------------------------
# Pure-JAX reference
# --------------------------------------------------------------------------
def gated_fusion_reference(input1, input2, w1, w2):
    se = jnp.mean(input1, axis=2)                      # (B, C_in)
    se = jnp.maximum(se @ w1.T, 0.0)                   # (B, H)
    se = jax.nn.sigmoid(se @ w2.T)                     # (B, L+1)
    se = se[:, :, None, None, None]
    x = input2 * se
    return jnp.mean(x, axis=1)                         # (B, C, N, T)


if __name__ == "__main__":
    # Module hyper-params (matching the PyTorch spec)
    skip_channels = 4
    layer_num = 3
    ratio = 1
    Lp1 = layer_num + 1
    C_in = skip_channels * Lp1        # dense1 in_features = 16
    H = Lp1 * ratio                   # dense1 out_features = 4

    # Small example shapes
    B, C, N, T = 2, skip_channels, 8, 1

    key = jax.random.PRNGKey(0)
    k1, k2, k3, k4 = jax.random.split(key, 4)

    input1 = jax.random.normal(k1, (B, C_in, N), dtype=jnp.float32)
    input2 = jax.random.normal(k2, (B, Lp1, C, N, T), dtype=jnp.float32)

    # Deterministic parameter init (PyTorch Linear weight shape: (out, in), bias=False)
    w1 = 0.1 * jax.random.normal(k3, (H, C_in), dtype=jnp.float32)
    w2 = 0.1 * jax.random.normal(k4, (Lp1, H), dtype=jnp.float32)

    out = gated_fusion_forward(input1, input2, w1, w2)
    out = jax.block_until_ready(out)

    ref = gated_fusion_reference(input1, input2, w1, w2)
    assert out.shape == (B, C, N, T), out.shape
    assert jnp.allclose(out, ref, atol=1e-5, rtol=1e-5), "mismatch vs reference"

    print("KERNEL_OK")
</pallas_src>

<mosaic_0001>
module attributes {stable_mosaic.version = 11 : i64} {
  func.func @_gate_kernel(%arg0: memref<2x16x8xf32, #tpu.memory_space<vmem>>, %arg1: memref<16x4xf32, #tpu.memory_space<vmem>>, %arg2: memref<4x4xf32, #tpu.memory_space<vmem>>, %arg3: memref<2x4xf32, #tpu.memory_space<vmem>>) attributes {dimension_semantics = [], scalar_prefetch = 0 : i64, scratch_operands = 0 : i64, tpu.core_type = #tpu.core_type<tc>} {
    %c0 = arith.constant 0 : index
    %c0_0 = arith.constant 0 : index
    %c0_1 = arith.constant 0 : index
    %0 = vector.load %arg0[%c0, %c0_0, %c0_1] : memref<2x16x8xf32, #tpu.memory_space<vmem>>, vector<2x16x8xf32>
    %cst = arith.constant dense<0.000000e+00> : vector<2x16xf32>
    %1 = vector.multi_reduction <add>, %0, %cst [2] : vector<2x16x8xf32> to vector<2x16xf32>
    %cst_2 = arith.constant 8.000000e+00 : f32
    %2 = vector.broadcast %cst_2 : f32 to vector<2x16xf32>
    %3 = arith.divf %1, %2 : vector<2x16xf32>
    %c0_3 = arith.constant 0 : index
    %c0_4 = arith.constant 0 : index
    %4 = vector.load %arg1[%c0_3, %c0_4] : memref<16x4xf32, #tpu.memory_space<vmem>>, vector<16x4xf32>
    %cst_5 = arith.constant dense<0.000000e+00> : vector<2x4xf32>
    %5 = tpu.matmul %3, %4, %cst_5 {dimension_numbers = #tpu.dot_dimension_numbers<[1], [0], [0], [1], [0, 0, 1, 1], [], []>} : vector<2x16xf32>, vector<16x4xf32>, vector<2x4xf32> -> vector<2x4xf32>
    %cst_6 = arith.constant 0.000000e+00 : f32
    %6 = vector.broadcast %cst_6 : f32 to vector<2x4xf32>
    %7 = arith.maximumf %5, %6 : vector<2x4xf32>
    %c0_7 = arith.constant 0 : index
    %c0_8 = arith.constant 0 : index
    %8 = vector.load %arg2[%c0_7, %c0_8] : memref<4x4xf32, #tpu.memory_space<vmem>>, vector<4x4xf32>
    %cst_9 = arith.constant dense<0.000000e+00> : vector<2x4xf32>
    %9 = tpu.matmul %7, %8, %cst_9 {dimension_numbers = #tpu.dot_dimension_numbers<[1], [0], [0], [1], [0, 0, 1, 1], [], []>} : vector<2x4xf32>, vector<4x4xf32>, vector<2x4xf32> -> vector<2x4xf32>
    %10 = arith.negf %9 : vector<2x4xf32>
    %11 = math.exp %10 : vector<2x4xf32>
    %cst_10 = arith.constant 1.000000e+00 : f32
    %12 = vector.broadcast %cst_10 : f32 to vector<2x4xf32>
    %13 = arith.addf %12, %11 : vector<2x4xf32>
    %14 = arith.divf %12, %13 : vector<2x4xf32>
    %cst_11 = arith.constant 2.500000e-01 : f32
    %15 = vector.broadcast %cst_11 : f32 to vector<2x4xf32>
    %16 = arith.mulf %14, %15 : vector<2x4xf32>
    %c0_12 = arith.constant 0 : index
    %c0_13 = arith.constant 0 : index
    %17 = vector.load %arg3[%c0_12, %c0_13] : memref<2x4xf32, #tpu.memory_space<vmem>>, vector<2x4xf32>
    tpu.vector_store %arg3[%c0_12, %c0_13], %16 {strides = array<i32>} : memref<2x4xf32, #tpu.memory_space<vmem>>, vector<2x4xf32>,
    return
  }
}

</mosaic_0001>

<llo_original>
// kernel: tpu_custom_call.1
$region0: #{tpu_custom_call.1}
  #allocation0 [shape = 'u32[]', space=smem, size = 0x4, offset = 0x4, fixed_abs, tag = 'smem constant byte address 0x4 - core index']
  #allocation1 [shape = 'u32[144,128]{1,0:T(1,128)}', space=vmem, size = 0x12000, scoped, tag = 'internal scratch']
  %s0 = inlined_call_operand.vmem [shape: f32[2,16,8], index: 0, kind: input, shape index: {}]
  %s1 = inlined_call_operand.vmem [shape: f32[16,4], index: 1, kind: input, shape index: {}]
  %s2 = inlined_call_operand.vmem [shape: f32[4,4], index: 2, kind: input, shape index: {}]
  %s3 = inlined_call_operand.hbm [shape: f32[2,4], index: 3, kind: output, shape index: {}]
  %s4 = sld [smem:[#allocation0]]
  $region22: #{tpu_custom_call.1} parent=0
    _
  %s6 = ssub.s32 1, %s4
  %s7 = scalar_select 0, %s6, %s4
  $region1: #{tpu_custom_call.1} parent=0
    #allocation2 [shape = 'u8[1024]{0}', space=vmem, size = 0x400, scoped, tag = 'output window, operand 0, single buffered']
    #allocation3 [shape = 's32[1]{0}', space=sflag, size = 0x4, scoped, tag = 'scoped memory for tpu_custom_call.1']
    %8 = vsyncpa [#allocation3], 0
    // Predicated region
    $region2: #{tpu_custom_call.1} parent=1 // pred_check
      _
    $region3: #{tpu_custom_call.1} parent=1 // pred_check_branch
      %10 = sbr.rel (0) target = $region5
    $region4: #{tpu_custom_call.1} parent=1 // pred_region
      _
    $region5: #{tpu_custom_call.1} parent=1 // pred_fallthru
      _
    // Predicated region
    $region6: #{tpu_custom_call.1} parent=1 // pred_check
      _
    $region7: #{tpu_custom_call.1} parent=1 // pred_check_branch
      %12 = sbr.rel (0) target = $region9
    $region8: #{tpu_custom_call.1} parent=1 // pred_region
      _
    $region9: #{tpu_custom_call.1} parent=1 // pred_fallthru
      _
    // Predicated region
    $region10: #{tpu_custom_call.1} parent=1 // pred_check
      _
    $region11: #{tpu_custom_call.1} parent=1 // pred_check_branch
      %14 = sbr.rel (0) target = $region13
    $region12: #{tpu_custom_call.1} parent=1 // pred_region
      _
    $region13: #{tpu_custom_call.1} parent=1 // pred_fallthru
      _
    %v15 = vld [vmem:[%s0] sm:$0xff]
    %v16 = vld [vmem:[%s0 + $0x8] sm:$0xff]
    %v17 = vld [vmem:[%s0 + $0x10] sm:$0xff]
    %v18 = vld [vmem:[%s0 + $0x18] sm:$0xff]
    %vm19 = vcmask 64512
    %v20 = vsel %vm19, %v15, 0.0
    %21 = vadd.xlane.f32.xlu0 %v20
    %v22 = vpop.xlane.xlu0 %21
    %v23 = vsel %vm19, %v16, 0.0
    %24 = vadd.xlane.f32.xlu0 %v23
    %v25 = vpop.xlane.xlu0 %24
    %v26 = vsel %vm19, %v17, 0.0
    %27 = vadd.xlane.f32.xlu0 %v26
    %v28 = vpop.xlane.xlu0 %27
    %v29 = vsel %vm19, %v18, 0.0
    %30 = vadd.xlane.f32.xlu0 %v29
    %v31 = vpop.xlane.xlu0 %30
    %v32 = vrcp.pop 8.0
    %v33 = vmul.f32 %v22, %v32
    %v34 = vmul.f32 %v25, %v32
    %v35 = vmul.f32 %v28, %v32
    %v36 = vmul.f32 %v31, %v32
    %v37 = vld [vmem:[%s1] sm:$0xff]
    %v38 = vld [vmem:[%s1 + $0x8] sm:$0xff]
    %v43 = vlaneseq
    %v44 = vand.u32 %v43, 127
    %v45 = vlaneseq
    %v46 = vshrl.u32 %v45, 7
    %v47 = vsub.s32 %v44, %v46
    %v48 = vrot.slane %v33, %v47
    %v49 = vadd.s32 %v44, 4294967288
    %v50 = vlaneseq
    %v51 = vshrl.u32 %v50, 7
    %v52 = vsub.s32 %v49, %v51
    %v53 = vrot.slane %v34, %v52
    %vm54 = vcmask 130112
    %v55 = vsel %vm54, %v53, %v48
    %v56 = vlaneseq
    %v57 = vshrl.u32 %v56, 7
    %v58 = vsub.s32 %v44, %v57
    %v59 = vrot.slane %v35, %v58
    %v60 = vlaneseq
    %v61 = vshrl.u32 %v60, 7
    %v62 = vsub.s32 %v49, %v61
    %v63 = vrot.slane %v36, %v62
    %v64 = vsel %vm54, %v63, %v59
    %vm65 = vcmask 1041409
    %v66 = vsel %vm65, %v64, %v55
    %vm67 = vcmask 130048
    %v68 = vsel %vm67, %v66, 0
    %70 = vmatprep.subr.mxu0 0.0
    %71 = vmatpush1.msra.mxu0 0.0
    %72 = vmatprep.subr.mxu0 0.0
    %73 = vmatpush1.msra.mxu0 0.0
    %74 = vmatprep.subr.mxu0 0.0
    %75 = vmatpush1.msra.mxu0 0.0
    %76 = vmatprep.subr.mxu0 0.0
    %77 = vmatpush1.msra.mxu0 0.0
    %78 = vmatprep.subr.mxu0 0.0
    %79 = vmatpush1.msra.mxu0 0.0
    %80 = vmatprep.subr.mxu0 0.0
    %81 = vmatpush1.msra.mxu0 0.0
    %82 = vmatprep.subr.mxu0 0.0
    %83 = vmatpush1.msra.mxu0 0.0
    %84 = vmatprep.subr.mxu0 0.0
    %85 = vmatpush1.msra.mxu0 0.0
    %86 = vmatprep.subr.mxu0 0.0
    %87 = vmatpush1.msra.mxu0 0.0
    %88 = vmatprep.subr.mxu0 0.0
    %89 = vmatpush1.msra.mxu0 0.0
    %90 = vmatprep.subr.mxu0 0.0
    %91 = vmatpush1.msra.mxu0 0.0
    %92 = vmatprep.subr.mxu0 0.0
    %93 = vmatpush1.msra.mxu0 0.0
    %94 = vmatprep.subr.mxu0 0.0
    %95 = vmatpush1.msra.mxu0 0.0
    %96 = vmatprep.subr.mxu0 0.0
    %97 = vmatpush1.msra.mxu0 0.0
    %98 = vmatprep.subr.mxu0 0.0
    %99 = vmatpush1.msra.mxu0 %v38
    %100 = vmatprep.subr.mxu0 0.0
    %101 = vmatpush1.msra.mxu0 %v37
    %102 = vmatprep.subr.mxu0 0.0
    %103 = vmatpush2.msra.mxu0 0.0
    %104 = vmatprep.subr.mxu0 0.0
    %105 = vmatpush2.msra.mxu0 0.0
    %106 = vmatprep.subr.mxu0 0.0
    %107 = vmatpush2.msra.mxu0 0.0
    %108 = vmatprep.subr.mxu0 0.0
    %109 = vmatpush2.msra.mxu0 0.0
    %110 = vmatprep.subr.mxu0 0.0
    %111 = vmatpush2.msra.mxu0 0.0
    %112 = vmatprep.subr.mxu0 0.0
    %113 = vmatpush2.msra.mxu0 0.0
    %114 = vmatprep.subr.mxu0 0.0
    %115 = vmatpush2.msra.mxu0 0.0
    %116 = vmatprep.subr.mxu0 0.0
    %117 = vmatpush2.msra.mxu0 0.0
    %118 = vmatprep.subr.mxu0 0.0
    %119 = vmatpush2.msra.mxu0 0.0
    %120 = vmatprep.subr.mxu0 0.0
    %121 = vmatpush2.msra.mxu0 0.0
    %122 = vmatprep.subr.mxu0 0.0
    %123 = vmatpush2.msra.mxu0 0.0
    %124 = vmatprep.subr.mxu0 0.0
    %125 = vmatpush2.msra.mxu0 0.0
    %126 = vmatprep.subr.mxu0 0.0
    %127 = vmatpush2.msra.mxu0 0.0
    %128 = vmatprep.subr.mxu0 0.0
    %129 = vmatpush2.msra.mxu0 0.0
    %130 = vmatprep.subr.mxu0 0.0
    %131 = vmatpush2.msra.mxu0 0.0
    %132 = vmatprep.subr.mxu0 0.0
    %133 = vmatpush2.msra.mxu0 0.0
    %134 = vmatprep.mubr.f32.mxu0 0.0
    %135 = vmatmul.mubr.f32.gmra.mxu0 %v68
    %v136 = vpop.f32.mrf.mxu0
    %v137 = vadd.f32 0.0, %v136
    %v138 = vpop.f32.mrf.mxu0
    %139 = vdwg.mxu0
    %v140 = vmax.f32 %v137, 0.0
    %v141 = vld [vmem:[%s2] sm:$0xf]
    %vm142 = vcmask 31744
    %v144 = vsel %vm142, %v140, 0
    %vm146 = vcmask 1043456
    %v148 = vsel %vm146, %v141, 0
    %150 = vmatprep.subr.mxu0 0.0
    %151 = vmatpush1.msra.mxu0 0.0
    %152 = vmatprep.subr.mxu0 0.0
    %153 = vmatpush1.msra.mxu0 0.0
    %154 = vmatprep.subr.mxu0 0.0
    %155 = vmatpush1.msra.mxu0 0.0
    %156 = vmatprep.subr.mxu0 0.0
    %157 = vmatpush1.msra.mxu0 0.0
    %158 = vmatprep.subr.mxu0 0.0
    %159 = vmatpush1.msra.mxu0 0.0
    %160 = vmatprep.subr.mxu0 0.0
    %161 = vmatpush1.msra.mxu0 0.0
    %162 = vmatprep.subr.mxu0 0.0
    %163 = vmatpush1.msra.mxu0 0.0
    %164 = vmatprep.subr.mxu0 0.0
    %165 = vmatpush1.msra.mxu0 0.0
    %166 = vmatprep.subr.mxu0 0.0
    %167 = vmatpush1.msra.mxu0 0.0
    %168 = vmatprep.subr.mxu0 0.0
    %169 = vmatpush1.msra.mxu0 0.0
    %170 = vmatprep.subr.mxu0 0.0
    %171 = vmatpush1.msra.mxu0 0.0
    %172 = vmatprep.subr.mxu0 0.0
    %173 = vmatpush1.msra.mxu0 0.0
    %174 = vmatprep.subr.mxu0 0.0
    %175 = vmatpush1.msra.mxu0 0.0
    %176 = vmatprep.subr.mxu0 0.0
    %177 = vmatpush1.msra.mxu0 0.0
    %178 = vmatprep.subr.mxu0 0.0
    %179 = vmatpush1.msra.mxu0 0.0
    %180 = vmatprep.subr.mxu0 0.0
    %181 = vmatpush1.msra.mxu0 %v148
    %182 = vmatprep.subr.mxu0 0.0
    %183 = vmatpush2.msra.mxu0 0.0
    %184 = vmatprep.subr.mxu0 0.0
    %185 = vmatpush2.msra.mxu0 0.0
    %186 = vmatprep.subr.mxu0 0.0
    %187 = vmatpush2.msra.mxu0 0.0
    %188 = vmatprep.subr.mxu0 0.0
    %189 = vmatpush2.msra.mxu0 0.0
    %190 = vmatprep.subr.mxu0 0.0
    %191 = vmatpush2.msra.mxu0 0.0
    %192 = vmatprep.subr.mxu0 0.0
    %193 = vmatpush2.msra.mxu0 0.0
    %194 = vmatprep.subr.mxu0 0.0
    %195 = vmatpush2.msra.mxu0 0.0
    %196 = vmatprep.subr.mxu0 0.0
    %197 = vmatpush2.msra.mxu0 0.0
    %198 = vmatprep.subr.mxu0 0.0
    %199 = vmatpush2.msra.mxu0 0.0
    %200 = vmatprep.subr.mxu0 0.0
    %201 = vmatpush2.msra.mxu0 0.0
    %202 = vmatprep.subr.mxu0 0.0
    %203 = vmatpush2.msra.mxu0 0.0
    %204 = vmatprep.subr.mxu0 0.0
    %205 = vmatpush2.msra.mxu0 0.0
    %206 = vmatprep.subr.mxu0 0.0
    %207 = vmatpush2.msra.mxu0 0.0
    %208 = vmatprep.subr.mxu0 0.0
    %209 = vmatpush2.msra.mxu0 0.0
    %210 = vmatprep.subr.mxu0 0.0
    %211 = vmatpush2.msra.mxu0 0.0
    %212 = vmatprep.subr.mxu0 0.0
    %213 = vmatpush2.msra.mxu0 0.0
    %214 = vmatprep.mubr.f32.mxu0 0.0
    %215 = vmatmul.mubr.f32.gmra.mxu0 %v144
    %v216 = vpop.f32.mrf.mxu0
    %v217 = vadd.f32 0.0, %v216
    %v218 = vpop.f32.mrf.mxu0
    %219 = vdwg.mxu0
    %v220 = vxor.u32 %v217, 2147483648
    %v221 = vmul.f32 %v220, 1.442695
    %v222 = vpow.pop %v221
    %v223 = vadd.f32 %v222, 1.0
    %v224 = vrcp.pop %v223
    %v225 = vmul.f32 1.0, %v224
    %v226 = vmul.f32 %v225, 0.25
    %vm227 = vcmask 25600
    %228 = vst.msk [vmem:[#allocation2] sm:$0x3] %vm227, %v226
    // Predicated region
    $region14: #{tpu_custom_call.1} parent=1 // pred_check
      _
    $region15: #{tpu_custom_call.1} parent=1 // pred_check_branch
      %230 = sbr.rel (0) target = $region17
    $region16: #{tpu_custom_call.1} parent=1 // pred_region
      %s232 = ssub.s32 32, 32
      %233 = vsyncadd [#allocation3], %s232
      %s235 = sshll.u32 [#allocation2], 4
      %s236 = int_to_ptr.vmem [resolvable:$true] %s235
      %238 = dma.vmem_to_hbm [thread:$0]  %s236, 32, %s3, [#allocation3]
    $region17: #{tpu_custom_call.1} parent=1 // pred_fallthru
      _
    // Predicated region
    $region18: #{tpu_custom_call.1} parent=1 // pred_check
      _
    $region19: #{tpu_custom_call.1} parent=1 // pred_check_branch
      %240 = sbr.rel (0) target = $region21
    $region20: #{tpu_custom_call.1} parent=1 // pred_region
      %241 = dma.done [#allocation3], 32
    $region21: #{tpu_custom_call.1} parent=1 // pred_fallthru
      _
    %242 = vsyncpa [#allocation3], 1

</llo_original>
